<compile_context>
chip_gen: v5e
topology: v5e:2x2
jax: 0.10.0
libtpu: 0.0.40
codegen_flags: <defaults>
</compile_context>

<pallas_src>
import functools

import jax
import jax.numpy as jnp
from jax.experimental import pallas as pl
from jax.experimental.pallas import tpu as pltpu


def _round_up(x, m):
    return (x + m - 1) // m * m


def _nfl_kernel(pred_ref, label_ref, out_ref, t_acc, b_acc, s_acc, *,
                num_classes, rows_valid, tile_rows, ragged,
                ignore_label, gamma, eps):
    # pred_ref:  (1, C, TR, 128)  native-dtype logits
    # label_ref: (1, 1, TR, 128)  int32
    # out_ref:   (1, 1, 1)        f32
    # t_acc/b_acc/s_acc: VMEM (TR, 128) f32 vector accumulators
    t_idx = pl.program_id(1)
    n_t = pl.num_programs(1)

    @pl.when(t_idx == 0)
    def _():
        t_acc[...] = jnp.zeros_like(t_acc)
        b_acc[...] = jnp.zeros_like(b_acc)
        s_acc[...] = jnp.zeros_like(s_acc)

    lbl = label_ref[0, 0]                                      # (TR, 128) int32
    if ragged:
        # Last tile is partially out-of-bounds along rows: force label to
        # ignore_label there BEFORE `valid` is computed so the (unspecified)
        # OOB data contributes exactly zero.
        row_ids = (jax.lax.broadcasted_iota(jnp.int32, lbl.shape, 0)
                   + t_idx * tile_rows)
        lbl = jnp.where(row_ids < rows_valid, lbl, jnp.int32(ignore_label))

    logits = pred_ref[0].astype(jnp.float32)                   # (C, TR, 128)
    m = jnp.max(logits, axis=0)                                 # (TR, 128) plane-wise

    # Fused stable-softmax denominator + label gather (unrolled over C):
    # one exp + add + compare/select per channel, no iota / onehot.
    s = jnp.zeros(lbl.shape, jnp.float32)
    e_lbl = jnp.zeros(lbl.shape, jnp.float32)
    for c in range(num_classes):
        ec = jnp.exp(logits[c] - m)
        s = s + ec
        e_lbl = jnp.where(lbl == c, ec, e_lbl)

    valid = lbl != ignore_label                                 # (TR, 128) bool
    # NOTE: exact divide (pl.reciprocal(approx=True) would break tolerances).
    pt = jnp.where(valid, e_lbl / s, jnp.float32(1.0))
    one_m = 1.0 - pt
    beta = one_m ** gamma                                       # int gamma -> multiply
    logmin = jnp.log(jnp.minimum(pt + eps, 1.0))

    t_acc[...] += jnp.where(valid, jnp.float32(1.0), jnp.float32(0.0))
    b_acc[...] += beta
    s_acc[...] += beta * logmin

    @pl.when(t_idx == n_t - 1)
    def _():
        t_sum = jnp.sum(t_acc[...])
        beta_sum = jnp.sum(b_acc[...])
        s_sum = jnp.sum(s_acc[...])
        mult = t_sum / (beta_sum + eps)                         # detached delimiter (fwd)
        loss = -(mult * s_sum) / (t_sum + eps)                  # size_average=True
        out_ref[...] = jnp.full((1, 1, 1), loss, dtype=jnp.float32)


def normalized_focal_loss_softmax(pred_nchw, label_nhw, *, ignore_label=-1,
                                  gamma=2, eps=1e-10, tile_rows=None,
                                  vmem_budget_bytes=8 * 1024 * 1024):
    """pred_nchw: (N, C, H, W), label_nhw: (N, H, W) int. Returns (N,) f32."""
    n, c, h, w = pred_nchw.shape
    hw = h * w
    hw_p = _round_up(hw, 128)
    rows = hw_p // 128

    # Free, row-major metadata reshapes of the native NCHW layout.
    pred_r = pred_nchw.reshape(n, c, hw)
    label_r = label_nhw.reshape(n, 1, hw).astype(jnp.int32)
    if hw_p != hw:
        # TODO(synk): <128-pixel copy-pad needed only when H*W % 128 != 0 so the
        # free reshape to (..., ROWS, 128) is legal; padded labels = ignore.
        pred_r = jnp.pad(pred_r, ((0, 0), (0, 0), (0, hw_p - hw)))
        label_r = jnp.pad(label_r, ((0, 0), (0, 0), (0, hw_p - hw)),
                          constant_values=ignore_label)
    pred_r = pred_r.reshape(n, c, rows, 128)
    label_r = label_r.reshape(n, 1, rows, 128)

    dtype_bytes = jnp.dtype(pred_nchw.dtype).itemsize
    if tile_rows is None:
        # VMEM budget: 2x double-buffered pred block + 2x label block + f32
        # logits copy + ~6 live (TR,128) f32 temporaries + 3 f32 accumulators.
        bytes_per_row = 128 * (2 * c * dtype_bytes + 2 * 4 + (c + 9) * 4)
        tile_rows = max(8, (vmem_budget_bytes // bytes_per_row) // 8 * 8)
        tile_rows = min(tile_rows, 512)
    tile_rows = int(tile_rows)
    if tile_rows >= rows:
        tile_rows = rows                       # single tile: block == full extent
    else:
        tile_rows = max(8, tile_rows // 8 * 8)  # (8,128) BlockSpec constraint
    n_tiles = pl.cdiv(rows, tile_rows)
    ragged = (rows % tile_rows) != 0

    kernel = functools.partial(
        _nfl_kernel, num_classes=int(c), rows_valid=int(rows),
        tile_rows=int(tile_rows), ragged=bool(ragged),
        ignore_label=int(ignore_label), gamma=gamma, eps=float(eps))

    cost = pl.CostEstimate(
        flops=int(n * hw * (7 * c + 12)),
        transcendentals=int(n * hw * (c + 1)),
        bytes_accessed=int(n * hw * (c * dtype_bytes + 4) + n * 4))

    out = pl.pallas_call(
        kernel,
        out_shape=jax.ShapeDtypeStruct((n, 1, 1), jnp.float32),
        grid_spec=pltpu.PrefetchScalarGridSpec(
            num_scalar_prefetch=0,
            grid=(n, n_tiles),
            in_specs=[
                pl.BlockSpec((1, c, tile_rows, 128), lambda b, t: (b, 0, t, 0)),
                pl.BlockSpec((1, 1, tile_rows, 128), lambda b, t: (b, 0, t, 0)),
            ],
            out_specs=pl.BlockSpec((1, 1, 1), lambda b, t: (b, 0, 0)),
            scratch_shapes=[pltpu.VMEM((tile_rows, 128), jnp.float32)] * 3,
        ),
        compiler_params=pltpu.CompilerParams(
            dimension_semantics=("parallel", "arbitrary"),
            vmem_limit_bytes=32 * 1024 * 1024),
        cost_estimate=cost,
    )(pred_r, label_r)
    return out.reshape(n)


def _reference(pred, label, ignore_label=-1, gamma=2, eps=1e-10):
    """Pure-JAX transcription of the PyTorch forward (for verification)."""
    n, c, h, w = pred.shape
    sm = jax.nn.softmax(pred.astype(jnp.float32), axis=1)
    lbl = label[:, None, :, :]
    onehot = (jnp.arange(c)[None, :, None, None] == lbl).astype(jnp.float32)
    pt = jnp.sum(sm * onehot, axis=1, keepdims=True)
    t = lbl != ignore_label
    pt = jnp.where(t, pt, jnp.ones_like(pt))
    beta = (1.0 - pt) ** gamma
    t_sum = jnp.sum(t.astype(jnp.float32), axis=(-2, -1), keepdims=True)
    beta_sum = jnp.sum(beta, axis=(-2, -1), keepdims=True)
    mult = t_sum / (beta_sum + eps)
    beta = beta * mult
    loss = -beta * jnp.log(jnp.minimum(pt + eps, 1.0))
    bsum = jnp.sum(t_sum, axis=(1, 2, 3))
    return jnp.sum(loss, axis=(1, 2, 3)) / (bsum + eps)


if __name__ == "__main__":
    key = jax.random.PRNGKey(0)
    k1, k2, k3, k4, k5, k6 = jax.random.split(key, 6)

    # Case 1: spec-sized small shapes (N=2, C=4, 16x16). HW=256 -> ROWS=2,
    # single row tile (block equals full rows extent).
    pred = jax.random.normal(k1, (2, 4, 16, 16), dtype=jnp.float32)
    label = jax.random.randint(k2, (2, 16, 16), 0, 4, dtype=jnp.int32)
    label = jnp.where(jax.random.bernoulli(k3, 0.1, (2, 16, 16)),
                      jnp.int32(-1), label)
    loss = jax.block_until_ready(normalized_focal_loss_softmax(pred, label))
    ref = _reference(pred, label)
    assert loss.shape == (2,), loss.shape
    assert jnp.allclose(loss, ref, rtol=2e-5, atol=1e-6), (loss, ref)

    # Case 2: exercises multi-tile streaming, the <128-px lane pad and the
    # ragged (in-kernel masked) last row tile: C=5, 40x40 -> HW=1600 ->
    # ROWS=13, tile_rows=8 -> grid (2, 2) with a 5-valid-row final tile.
    pred2 = jax.random.normal(k4, (2, 5, 40, 40), dtype=jnp.float32)
    label2 = jax.random.randint(k5, (2, 40, 40), 0, 5, dtype=jnp.int32)
    label2 = jnp.where(jax.random.bernoulli(k6, 0.15, (2, 40, 40)),
                       jnp.int32(-1), label2)
    loss2 = jax.block_until_ready(
        normalized_focal_loss_softmax(pred2, label2, tile_rows=8))
    ref2 = _reference(pred2, label2)
    assert jnp.allclose(loss2, ref2, rtol=2e-5, atol=1e-6), (loss2, ref2)

    print("KERNEL_OK")
</pallas_src>

<mosaic_0001>
module attributes {stable_mosaic.version = 11 : i64} {
  func.func @_nfl_kernel(%arg0: i32, %arg1: i32, %arg2: memref<1x4x2x128xf32, #tpu.memory_space<vmem>>, %arg3: memref<1x1x2x128xi32, #tpu.memory_space<vmem>>, %arg4: memref<1x1x1xf32, #tpu.memory_space<vmem>>, %arg5: memref<2x128xf32, #tpu.memory_space<vmem>>, %arg6: memref<2x128xf32, #tpu.memory_space<vmem>>, %arg7: memref<2x128xf32, #tpu.memory_space<vmem>>) attributes {dimension_semantics = [#tpu.dimension_semantics<parallel>, #tpu.dimension_semantics<arbitrary>], iteration_bounds = array<i64: 2, 1>, scalar_prefetch = 0 : i64, scratch_operands = 3 : i64, tpu.core_type = #tpu.core_type<tc>, window_params = [{transform_indices = @transform_0, window_bounds = array<i64: 1, 4, 2, 128>}, {transform_indices = @transform_1, window_bounds = array<i64: 1, 1, 2, 128>}, {transform_indices = @transform_2, window_bounds = array<i64: 1, 1, 1>}]} {
    %c0_i32 = arith.constant 0 : i32
    %0 = arith.cmpi eq, %arg1, %c0_i32 : i32
    %1 = arith.extui %0 : i1 to i32
    %c0_i32_0 = arith.constant 0 : i32
    %2 = arith.cmpi ne, %1, %c0_i32_0 : i32
    scf.if %2 {
      %cst_31 = arith.constant 0.000000e+00 : f32
      %71 = vector.broadcast %cst_31 : f32 to vector<2x128xf32>
      %c0_32 = arith.constant 0 : index
      %c0_33 = arith.constant 0 : index
      %72 = vector.load %arg5[%c0_32, %c0_33] : memref<2x128xf32, #tpu.memory_space<vmem>>, vector<2x128xf32>
      tpu.vector_store %arg5[%c0_32, %c0_33], %71 {strides = array<i32>} : memref<2x128xf32, #tpu.memory_space<vmem>>, vector<2x128xf32>,
      %cst_34 = arith.constant 0.000000e+00 : f32
      %73 = vector.broadcast %cst_34 : f32 to vector<2x128xf32>
      %c0_35 = arith.constant 0 : index
      %c0_36 = arith.constant 0 : index
      %74 = vector.load %arg6[%c0_35, %c0_36] : memref<2x128xf32, #tpu.memory_space<vmem>>, vector<2x128xf32>
      tpu.vector_store %arg6[%c0_35, %c0_36], %73 {strides = array<i32>} : memref<2x128xf32, #tpu.memory_space<vmem>>, vector<2x128xf32>,
      %cst_37 = arith.constant 0.000000e+00 : f32
      %75 = vector.broadcast %cst_37 : f32 to vector<2x128xf32>
      %c0_38 = arith.constant 0 : index
      %c0_39 = arith.constant 0 : index
      %76 = vector.load %arg7[%c0_38, %c0_39] : memref<2x128xf32, #tpu.memory_space<vmem>>, vector<2x128xf32>
      tpu.vector_store %arg7[%c0_38, %c0_39], %75 {strides = array<i32>} : memref<2x128xf32, #tpu.memory_space<vmem>>, vector<2x128xf32>,
    } else {
    }
    %c0 = arith.constant 0 : index
    %c0_1 = arith.constant 0 : index
    %c0_2 = arith.constant 0 : index
    %c0_3 = arith.constant 0 : index
    %3 = vector.load %arg3[%c0, %c0_1, %c0_2, %c0_3] : memref<1x1x2x128xi32, #tpu.memory_space<vmem>>, vector<1x1x2x128xi32>
    %4 = vector.shape_cast %3 : vector<1x1x2x128xi32> to vector<2x128xi32>
    %c0_4 = arith.constant 0 : index
    %c0_5 = arith.constant 0 : index
    %c0_6 = arith.constant 0 : index
    %c0_7 = arith.constant 0 : index
    %5 = vector.load %arg2[%c0_4, %c0_5, %c0_6, %c0_7] : memref<1x4x2x128xf32, #tpu.memory_space<vmem>>, vector<1x4x2x128xf32>
    %6 = vector.shape_cast %5 : vector<1x4x2x128xf32> to vector<4x2x128xf32>
    %cst = arith.constant dense<0xFF800000> : vector<2x128xf32>
    %7 = vector.multi_reduction <maximumf>, %6, %cst [0] : vector<4x2x128xf32> to vector<2x128xf32>
    %cst_8 = arith.constant 0.000000e+00 : f32
    %8 = vector.broadcast %cst_8 : f32 to vector<2x128xf32>
    %cst_9 = arith.constant 0.000000e+00 : f32
    %9 = vector.broadcast %cst_9 : f32 to vector<2x128xf32>
    %10 = vector.extract_strided_slice %6 {offsets = [0, 0, 0], sizes = [1, 2, 128], strides = [1, 1, 1]} : vector<4x2x128xf32> to vector<1x2x128xf32>
    %11 = vector.shape_cast %10 : vector<1x2x128xf32> to vector<2x128xf32>
    %12 = arith.subf %11, %7 : vector<2x128xf32>
    %13 = math.exp %12 : vector<2x128xf32>
    %14 = arith.addf %8, %13 : vector<2x128xf32>
    %c0_i32_10 = arith.constant 0 : i32
    %15 = vector.broadcast %c0_i32_10 : i32 to vector<2x128xi32>
    %16 = arith.cmpi eq, %4, %15 : vector<2x128xi32>
    %17 = arith.select %16, %13, %9 : vector<2x128xi1>, vector<2x128xf32>
    %18 = vector.extract_strided_slice %6 {offsets = [1, 0, 0], sizes = [1, 2, 128], strides = [1, 1, 1]} : vector<4x2x128xf32> to vector<1x2x128xf32>
    %19 = vector.shape_cast %18 : vector<1x2x128xf32> to vector<2x128xf32>
    %20 = arith.subf %19, %7 : vector<2x128xf32>
    %21 = math.exp %20 : vector<2x128xf32>
    %22 = arith.addf %14, %21 : vector<2x128xf32>
    %c1_i32 = arith.constant 1 : i32
    %23 = vector.broadcast %c1_i32 : i32 to vector<2x128xi32>
    %24 = arith.cmpi eq, %4, %23 : vector<2x128xi32>
    %25 = arith.select %24, %21, %17 : vector<2x128xi1>, vector<2x128xf32>
    %26 = vector.extract_strided_slice %6 {offsets = [2, 0, 0], sizes = [1, 2, 128], strides = [1, 1, 1]} : vector<4x2x128xf32> to vector<1x2x128xf32>
    %27 = vector.shape_cast %26 : vector<1x2x128xf32> to vector<2x128xf32>
    %28 = arith.subf %27, %7 : vector<2x128xf32>
    %29 = math.exp %28 : vector<2x128xf32>
    %30 = arith.addf %22, %29 : vector<2x128xf32>
    %c2_i32 = arith.constant 2 : i32
    %31 = vector.broadcast %c2_i32 : i32 to vector<2x128xi32>
    %32 = arith.cmpi eq, %4, %31 : vector<2x128xi32>
    %33 = arith.select %32, %29, %25 : vector<2x128xi1>, vector<2x128xf32>
    %34 = vector.extract_strided_slice %6 {offsets = [3, 0, 0], sizes = [1, 2, 128], strides = [1, 1, 1]} : vector<4x2x128xf32> to vector<1x2x128xf32>
    %35 = vector.shape_cast %34 : vector<1x2x128xf32> to vector<2x128xf32>
    %36 = arith.subf %35, %7 : vector<2x128xf32>
    %37 = math.exp %36 : vector<2x128xf32>
    %38 = arith.addf %30, %37 : vector<2x128xf32>
    %c3_i32 = arith.constant 3 : i32
    %39 = vector.broadcast %c3_i32 : i32 to vector<2x128xi32>
    %40 = arith.cmpi eq, %4, %39 : vector<2x128xi32>
    %41 = arith.select %40, %37, %33 : vector<2x128xi1>, vector<2x128xf32>
    %c-1_i32 = arith.constant -1 : i32
    %42 = vector.broadcast %c-1_i32 : i32 to vector<2x128xi32>
    %43 = arith.cmpi ne, %4, %42 : vector<2x128xi32>
    %44 = arith.divf %41, %38 : vector<2x128xf32>
    %cst_11 = arith.constant 1.000000e+00 : f32
    %45 = vector.broadcast %cst_11 : f32 to vector<2x128xf32>
    %46 = arith.select %43, %44, %45 : vector<2x128xi1>, vector<2x128xf32>
    %cst_12 = arith.constant 1.000000e+00 : f32
    %47 = vector.broadcast %cst_12 : f32 to vector<2x128xf32>
    %48 = arith.subf %47, %46 : vector<2x128xf32>
    %49 = arith.mulf %48, %48 : vector<2x128xf32>
    %cst_13 = arith.constant 1.000000e-10 : f32
    %50 = vector.broadcast %cst_13 : f32 to vector<2x128xf32>
    %51 = arith.addf %46, %50 : vector<2x128xf32>
    %cst_14 = arith.constant 1.000000e+00 : f32
    %52 = vector.broadcast %cst_14 : f32 to vector<2x128xf32>
    %53 = arith.minimumf %51, %52 : vector<2x128xf32>
    %54 = math.log %53 : vector<2x128xf32>
    %c0_15 = arith.constant 0 : index
    %c0_16 = arith.constant 0 : index
    %55 = vector.load %arg5[%c0_15, %c0_16] : memref<2x128xf32, #tpu.memory_space<vmem>>, vector<2x128xf32>
    %cst_17 = arith.constant 1.000000e+00 : f32
    %cst_18 = arith.constant 0.000000e+00 : f32
    %56 = vector.broadcast %cst_17 : f32 to vector<2x128xf32>
    %57 = vector.broadcast %cst_18 : f32 to vector<2x128xf32>
    %58 = arith.select %43, %56, %57 : vector<2x128xi1>, vector<2x128xf32>
    %59 = arith.addf %55, %58 : vector<2x128xf32>
    %c0_19 = arith.constant 0 : index
    %c0_20 = arith.constant 0 : index
    %60 = vector.load %arg5[%c0_19, %c0_20] : memref<2x128xf32, #tpu.memory_space<vmem>>, vector<2x128xf32>
    tpu.vector_store %arg5[%c0_19, %c0_20], %59 {strides = array<i32>} : memref<2x128xf32, #tpu.memory_space<vmem>>, vector<2x128xf32>,
    %c0_21 = arith.constant 0 : index
    %c0_22 = arith.constant 0 : index
    %61 = vector.load %arg6[%c0_21, %c0_22] : memref<2x128xf32, #tpu.memory_space<vmem>>, vector<2x128xf32>
    %62 = arith.addf %61, %49 : vector<2x128xf32>
    %c0_23 = arith.constant 0 : index
    %c0_24 = arith.constant 0 : index
    %63 = vector.load %arg6[%c0_23, %c0_24] : memref<2x128xf32, #tpu.memory_space<vmem>>, vector<2x128xf32>
    tpu.vector_store %arg6[%c0_23, %c0_24], %62 {strides = array<i32>} : memref<2x128xf32, #tpu.memory_space<vmem>>, vector<2x128xf32>,
    %c0_25 = arith.constant 0 : index
    %c0_26 = arith.constant 0 : index
    %64 = vector.load %arg7[%c0_25, %c0_26] : memref<2x128xf32, #tpu.memory_space<vmem>>, vector<2x128xf32>
    %65 = arith.mulf %49, %54 : vector<2x128xf32>
    %66 = arith.addf %64, %65 : vector<2x128xf32>
    %c0_27 = arith.constant 0 : index
    %c0_28 = arith.constant 0 : index
    %67 = vector.load %arg7[%c0_27, %c0_28] : memref<2x128xf32, #tpu.memory_space<vmem>>, vector<2x128xf32>
    tpu.vector_store %arg7[%c0_27, %c0_28], %66 {strides = array<i32>} : memref<2x128xf32, #tpu.memory_space<vmem>>, vector<2x128xf32>,
    %c0_i32_29 = arith.constant 0 : i32
    %68 = arith.cmpi eq, %arg1, %c0_i32_29 : i32
    %69 = arith.extui %68 : i1 to i32
    %c0_i32_30 = arith.constant 0 : i32
    %70 = arith.cmpi ne, %69, %c0_i32_30 : i32
    scf.if %70 {
      %c0_31 = arith.constant 0 : index
      %c0_32 = arith.constant 0 : index
      %71 = vector.load %arg5[%c0_31, %c0_32] : memref<2x128xf32, #tpu.memory_space<vmem>>, vector<2x128xf32>
      %72 = vector.shape_cast %71 : vector<2x128xf32> to vector<1x2x128xf32>
      %cst_33 = arith.constant dense<0.000000e+00> : vector<1xf32>
      %73 = vector.multi_reduction <add>, %72, %cst_33 [1, 2] : vector<1x2x128xf32> to vector<1xf32>
      %74 = vector.shape_cast %73 : vector<1xf32> to vector<1x1x1xf32>
      %75 = vector.extract %74[0, 0, 0] : f32 from vector<1x1x1xf32>
      %c0_34 = arith.constant 0 : index
      %c0_35 = arith.constant 0 : index
      %76 = vector.load %arg6[%c0_34, %c0_35] : memref<2x128xf32, #tpu.memory_space<vmem>>, vector<2x128xf32>
      %77 = vector.shape_cast %76 : vector<2x128xf32> to vector<1x2x128xf32>
      %cst_36 = arith.constant dense<0.000000e+00> : vector<1xf32>
      %78 = vector.multi_reduction <add>, %77, %cst_36 [1, 2] : vector<1x2x128xf32> to vector<1xf32>
      %79 = vector.shape_cast %78 : vector<1xf32> to vector<1x1x1xf32>
      %80 = vector.extract %79[0, 0, 0] : f32 from vector<1x1x1xf32>
      %c0_37 = arith.constant 0 : index
      %c0_38 = arith.constant 0 : index
      %81 = vector.load %arg7[%c0_37, %c0_38] : memref<2x128xf32, #tpu.memory_space<vmem>>, vector<2x128xf32>
      %82 = vector.shape_cast %81 : vector<2x128xf32> to vector<1x2x128xf32>
      %cst_39 = arith.constant dense<0.000000e+00> : vector<1xf32>
      %83 = vector.multi_reduction <add>, %82, %cst_39 [1, 2] : vector<1x2x128xf32> to vector<1xf32>
      %84 = vector.shape_cast %83 : vector<1xf32> to vector<1x1x1xf32>
      %85 = vector.extract %84[0, 0, 0] : f32 from vector<1x1x1xf32>
      %cst_40 = arith.constant 1.000000e-10 : f32
      %86 = arith.addf %80, %cst_40 : f32
      %87 = arith.divf %75, %86 : f32
      %88 = arith.mulf %87, %85 : f32
      %cst_41 = arith.constant 0.000000e+00 : f32
      %89 = arith.subf %cst_41, %88 : f32
      %cst_42 = arith.constant 1.000000e-10 : f32
      %90 = arith.addf %75, %cst_42 : f32
      %91 = arith.divf %89, %90 : f32
      %92 = vector.broadcast %91 : f32 to vector<1x1x1xf32>
      %c0_43 = arith.constant 0 : index
      %c0_44 = arith.constant 0 : index
      %c0_45 = arith.constant 0 : index
      %93 = vector.load %arg4[%c0_43, %c0_44, %c0_45] : memref<1x1x1xf32, #tpu.memory_space<vmem>>, vector<1x1x1xf32>
      tpu.vector_store %arg4[%c0_43, %c0_44, %c0_45], %92 {strides = array<i32>} : memref<1x1x1xf32, #tpu.memory_space<vmem>>, vector<1x1x1xf32>,
    } else {
    }
    return
  }
  func.func @transform_0(%arg0: i32, %arg1: i32) -> (i32, i32, i32, i32) {
    %c0_i32 = arith.constant 0 : i32
    %c0_i32_0 = arith.constant 0 : i32
    %c0_i32_1 = arith.constant 0 : i32
    return %arg0, %c0_i32, %arg1, %c0_i32_0 : i32, i32, i32, i32
  }
  func.func @transform_1(%arg0: i32, %arg1: i32) -> (i32, i32, i32, i32) {
    %c0_i32 = arith.constant 0 : i32
    %c0_i32_0 = arith.constant 0 : i32
    %c0_i32_1 = arith.constant 0 : i32
    return %arg0, %c0_i32, %arg1, %c0_i32_0 : i32, i32, i32, i32
  }
  func.func @transform_2(%arg0: i32, %arg1: i32) -> (i32, i32, i32) {
    %c0_i32 = arith.constant 0 : i32
    %c0_i32_0 = arith.constant 0 : i32
    %c0_i32_1 = arith.constant 0 : i32
    return %arg0, %c0_i32, %c0_i32_0 : i32, i32, i32
  }
}

</mosaic_0001>

<llo_original>
// kernel: tpu_custom_call.1
$region0: #{tpu_custom_call.1}
  #allocation0 [shape = 'u32[]', space=smem, size = 0x4, offset = 0x4, fixed_abs, tag = 'smem constant byte address 0x4 - core index']
  #allocation1 [shape = 'u32[72,128]{1,0:T(1,128)}', space=vmem, size = 0x9000, scoped, tag = 'internal scratch']
  #allocation2 [shape = 'f32[2,128]{1,0:T(2,128)}', space=vmem, size = 0x400, scoped, tag = 'scratch operand']
  #allocation3 [shape = 'f32[2,128]{1,0:T(2,128)}', space=vmem, size = 0x400, scoped, tag = 'scratch operand']
  #allocation4 [shape = 'f32[2,128]{1,0:T(2,128)}', space=vmem, size = 0x400, scoped, tag = 'scratch operand']
  %s0 = inlined_call_operand.hbm [shape: f32[2,4,2,128], index: 0, kind: input, shape index: {}]
  %s1 = inlined_call_operand.hbm [shape: s32[2,1,2,128], index: 1, kind: input, shape index: {}]
  %s2 = inlined_call_operand.vmem [shape: f32[2,1,1], index: 2, kind: output, shape index: {}]
  %s3 = sld [smem:[#allocation0]]
  $region57: #{tpu_custom_call.1} parent=0
    _
  %s5 = ssub.s32 1, %s3
  %s6 = scalar_select 0, %s5, %s3
  $region1: #{tpu_custom_call.1} parent=0
    #allocation5 [shape = 'u8[8192]{0}', space=vmem, size = 0x2000, scoped, tag = 'input window, operand 0']
    #allocation6 [shape = 's32[2]{0}', space=sflag, size = 0x8, scoped, tag = 'scoped memory for tpu_custom_call.1']
    #allocation7 [shape = 'u8[2048]{0}', space=vmem, size = 0x800, scoped, tag = 'input window, operand 1']
    #allocation8 [shape = 's32[2]{0}', space=sflag, size = 0x8, scoped, tag = 'scoped memory for tpu_custom_call.1']
    %7 = vsyncpa [#allocation6], 0
    %s8 = scalar_lea.sflag [#allocation6], 1
    %9 = vsyncpa %s8, 0
    %10 = vsyncpa [#allocation8], 0
    %s11 = scalar_lea.sflag [#allocation8], 1
    %12 = vsyncpa %s11, 0
    loop: start=0, step=1, limit=4
    $region2: #{tpu_custom_call.1} parent=1 // loop_pre_header
      _
    $region3: #{tpu_custom_call.1} parent=1 // loop_header
      %s14 = sphi 0, %s18
      %p15 = scmp.ge.s32.totalorder %s14, 4
      %s21 = sphi 0, %s33
      %s22 = sphi 0, %s29
      %s23 = sphi 0, %s21
      %s24 = sphi 0, %s22
      %s25 = sphi 0, %s23
      %s26 = sphi 0, %s24
      %s38 = sphi 0, %s40
      %s41 = sphi 0, %s38
      %s42 = sphi 0, %s41
      %s58 = sphi 0, %s42
      %s66 = sphi 0, %s68
      %s69 = sphi 0, %s66
      %s70 = sphi 0, %s69
      %s86 = sphi 0, %s70
      %s92 = sphi 0, %s94
      %s95 = sphi 0, %s92
      %s96 = sphi 0, %s95
      %s112 = sphi 0, %s96
    $region4: #{tpu_custom_call.1} parent=1 // loop_header_branch
      %17 = sbr.rel (%p15) target = $region8
    $region5: #{tpu_custom_call.1} parent=1 // loop_body
      %s19 = ssub.s32 %s14, 1
      %s20 = ssub.s32 %s14, 2
      %s27 = sadd.s32 1, %s22
      %p28 = scmp.ge.s32.totalorder %s27, 1
      %s29 = scalar_select %p28, 0, %s27
      %s30 = sadd.s32 1, %s21
      %s31 = scalar_select %p28, %s30, %s21
      %p32 = scmp.ge.s32.totalorder %s31, 2
      %s33 = scalar_select %p32, 0, %s31
      %s34 = ssub.s32 %s21, %s33
      %s35 = ssub.s32 %s22, %s29
      %s36 = sor.u32 %s34, %s35
      %p37 = scmp.eq.s32.totalorder %s36, 0
      %s39 = sadd.s32 %s38, 1
      %s40 = scalar_select %p37, %s38, %s39
      %p43 = pneg %p37
      %p44 = scmp.eq.s32.totalorder %s14, 1
      %p45 = por %p43, %p44
      %p46 = scmp.ne.s32.totalorder %s38, %s41
      %p47 = scmp.eq.s32.totalorder %s14, 0
      %p48 = por %p46, %p47
      %p49 = scmp.ne.s32.totalorder %s38, %s41
      %p50 = scmp.eq.s32.totalorder %s19, 1
      %p51 = por %p49, %p50
      %p52 = scmp.ne.s32.totalorder %s41, %s42
      %p53 = scmp.eq.s32.totalorder %s19, 0
      %p54 = por %p52, %p53
      %p55 = scmp.ne.s32.totalorder %s41, %s42
      %p56 = scmp.eq.s32.totalorder %s20, 1
      %p57 = por %p55, %p56
      %p59 = scmp.ne.s32.totalorder %s42, %s58
      %p60 = scmp.eq.s32.totalorder %s20, 0
      %p61 = por %p59, %p60
      %s62 = ssub.s32 %s21, %s33
      %s63 = ssub.s32 %s22, %s29
      %s64 = sor.u32 %s62, %s63
      %p65 = scmp.eq.s32.totalorder %s64, 0
      %s67 = sadd.s32 %s66, 1
      %s68 = scalar_select %p65, %s66, %s67
      %p71 = pneg %p65
      %p72 = scmp.eq.s32.totalorder %s14, 1
      %p73 = por %p71, %p72
      %p74 = scmp.ne.s32.totalorder %s66, %s69
      %p75 = scmp.eq.s32.totalorder %s14, 0
      %p76 = por %p74, %p75
      %p77 = scmp.ne.s32.totalorder %s66, %s69
      %p78 = scmp.eq.s32.totalorder %s19, 1
      %p79 = por %p77, %p78
      %p80 = scmp.ne.s32.totalorder %s69, %s70
      %p81 = scmp.eq.s32.totalorder %s19, 0
      %p82 = por %p80, %p81
      %p83 = scmp.ne.s32.totalorder %s69, %s70
      %p84 = scmp.eq.s32.totalorder %s20, 1
      %p85 = por %p83, %p84
      %p87 = scmp.ne.s32.totalorder %s70, %s86
      %p88 = scmp.eq.s32.totalorder %s20, 0
      %p89 = por %p87, %p88
      %s90 = ssub.s32 %s21, %s33
      %p91 = scmp.eq.s32.totalorder %s90, 0
      %s93 = sadd.s32 %s92, 1
      %s94 = scalar_select %p91, %s92, %s93
      %p97 = pneg %p91
      %p98 = scmp.eq.s32.totalorder %s14, 1
      %p99 = por %p97, %p98
      %p100 = scmp.ne.s32.totalorder %s92, %s95
      %p101 = scmp.eq.s32.totalorder %s14, 0
      %p102 = por %p100, %p101
      %p103 = scmp.ne.s32.totalorder %s92, %s95
      %p104 = scmp.eq.s32.totalorder %s19, 1
      %p105 = por %p103, %p104
      %p106 = scmp.ne.s32.totalorder %s95, %s96
      %p107 = scmp.eq.s32.totalorder %s19, 0
      %p108 = por %p106, %p107
      %p109 = scmp.ne.s32.totalorder %s95, %s96
      %p110 = scmp.eq.s32.totalorder %s20, 1
      %p111 = por %p109, %p110
      %p113 = scmp.ne.s32.totalorder %s96, %s112
      %p114 = scmp.eq.s32.totalorder %s20, 0
      %p115 = por %p113, %p114
      %p116 = scmp.le.s32.totalorder 1, %s14
      %p117 = scmp.lt.s32.totalorder %s14, 3
      %p118 = pnand %p116, %p117
      %p119 = pneg %p118
      // Predicated region
      $region9: #{tpu_custom_call.1} parent=5 // pred_check
        _
      $region10: #{tpu_custom_call.1} parent=5 // pred_check_branch
        %121 = sbr.rel (%p118) target = $region12
      $region11: #{tpu_custom_call.1} parent=5 // pred_region
        %s122 = ssub.s32 %s14, 1
      $region12: #{tpu_custom_call.1} parent=5 // pred_fallthru
        _
      %p123 = scmp.lt.s32.totalorder %s14, 2
      // Predicated region
      $region13: #{tpu_custom_call.1} parent=5 // pred_check
        %p124 = pneg %p123
      $region14: #{tpu_custom_call.1} parent=5 // pred_check_branch
        %126 = sbr.rel (%p124) target = $region16
      $region15: #{tpu_custom_call.1} parent=5 // pred_region
        // Predicated region
        $region17: #{tpu_custom_call.1} parent=15 // pred_check
          %p127 = pneg %p48
        $region18: #{tpu_custom_call.1} parent=15 // pred_check_branch
          %129 = sbr.rel (%p127) target = $region20
        $region19: #{tpu_custom_call.1} parent=15 // pred_region
          %s130 = sand.u32 %s38, 1
          %s131 = scalar_lea.sflag [#allocation6], %s130
          %s132 = sand.u32 %s38, 1
          %s133 = smul.addr %s132, 8
          %s134 = scalar_lea.vmem [#allocation5], %s133
          %136 = vsyncadd %s131, 0
          %s137 = smul.addr %s21, 4
          %s138 = sadd.s32 %s22, %s137
          %s139 = smul.addr %s138, 2
          %s140 = scalar_lea.hbm %s0, %s139
          %s141 = sshll.u32 %s140, 4
          %s142 = int_to_ptr.hbm [resolvable:$true] %s141
          %s143 = sshll.u32 %s134, 4
          %s144 = int_to_ptr.vmem [resolvable:$true] %s143
          %149 = dma.hbm_to_vmem [thread:$0]  %s142, 128, %s144, %s131, 32, 32, 2
        $region20: #{tpu_custom_call.1} parent=15 // pred_fallthru
          _
        // Predicated region
        $region21: #{tpu_custom_call.1} parent=15 // pred_check
          %p150 = pneg %p76
        $region22: #{tpu_custom_call.1} parent=15 // pred_check_branch
          %152 = sbr.rel (%p150) target = $region24
        $region23: #{tpu_custom_call.1} parent=15 // pred_region
          %s153 = sand.u32 %s66, 1
          %s154 = scalar_lea.sflag [#allocation8], %s153
          %s155 = sand.u32 %s66, 1
          %s156 = smul.addr %s155, 2
          %s157 = scalar_lea.vmem [#allocation7], %s156
          %159 = vsyncadd %s154, 0
          %s160 = sadd.s32 %s22, %s21
          %s161 = smul.addr %s160, 2
          %s162 = scalar_lea.hbm %s1, %s161
          %s164 = sshll.u32 %s162, 4
          %s165 = int_to_ptr.hbm [resolvable:$true] %s164
          %s166 = sshll.u32 %s157, 4
          %s167 = int_to_ptr.vmem [resolvable:$true] %s166
          %169 = dma.hbm_to_vmem [thread:$0]  %s165, 32, %s167, %s154
        $region24: #{tpu_custom_call.1} parent=15 // pred_fallthru
          _
      $region16: #{tpu_custom_call.1} parent=5 // pred_fallthru
        _
      %p170 = scmp.le.s32.totalorder 1, %s14
      %p171 = scmp.lt.s32.totalorder %s14, 3
      %p172 = pnand %p170, %p171
      %p173 = pneg %p172
      // Predicated region
      $region25: #{tpu_custom_call.1} parent=5 // pred_check
        _
      $region26: #{tpu_custom_call.1} parent=5 // pred_check_branch
        %175 = sbr.rel (%p172) target = $region28
      $region27: #{tpu_custom_call.1} parent=5 // pred_region
        %s176 = ssub.s32 %s14, 1
        %s177 = sand.u32 %s41, 1
        %s178 = scalar_lea.sflag [#allocation6], %s177
        %s179 = sand.u32 %s41, 1
        %s180 = smul.addr %s179, 8
        %s181 = scalar_lea.vmem [#allocation5], %s180
        // Predicated region
        $region29: #{tpu_custom_call.1} parent=27 // pred_check
          %p182 = pneg %p54
        $region30: #{tpu_custom_call.1} parent=27 // pred_check_branch
          %184 = sbr.rel (%p182) target = $region32
        $region31: #{tpu_custom_call.1} parent=27 // pred_region
          %186 = dma.done %s178, 128
        $region32: #{tpu_custom_call.1} parent=27 // pred_fallthru
          _
        %s187 = sand.u32 %s69, 1
        %s188 = scalar_lea.sflag [#allocation8], %s187
        %s189 = sand.u32 %s69, 1
        %s190 = smul.addr %s189, 2
        %s191 = scalar_lea.vmem [#allocation7], %s190
        // Predicated region
        $region33: #{tpu_custom_call.1} parent=27 // pred_check
          %p192 = pneg %p82
        $region34: #{tpu_custom_call.1} parent=27 // pred_check_branch
          %194 = sbr.rel (%p192) target = $region36
        $region35: #{tpu_custom_call.1} parent=27 // pred_region
          %196 = dma.done %s188, 32
        $region36: #{tpu_custom_call.1} parent=27 // pred_fallthru
          _
        %s197 = sand.u32 %s41, 1
        %s198 = scalar_lea.sflag [#allocation6], %s197
        %s199 = sand.u32 %s41, 1
        %s200 = smul.addr %s199, 8
        %s201 = scalar_lea.vmem [#allocation5], %s200
        %p202 = pneg %p54
        %p203 = pneg %p51
        %s204 = sand.u32 %s69, 1
        %s205 = scalar_lea.sflag [#allocation8], %s204
        %s206 = sand.u32 %s69, 1
        %s207 = smul.addr %s206, 2
        %s208 = scalar_lea.vmem [#allocation7], %s207
        %p209 = pneg %p82
        %p210 = pneg %p79
        %p211 = pneg %p108
        %p212 = pneg %p105
        %p213 = scmp.lt.s32.totalorder %s23, 1
        %s214 = scalar_select %p213, %s23, 1
        %s215 = scalar_lea.vmem %s2, %s214
        %p216 = scmp.lt.s32.totalorder %s23, 1
        %s217 = scalar_select %p216, %s23, 1
        %s218 = scalar_lea.vmem %s2, %s217
        %p219 = scmp.eq.s32.totalorder %s24, 0
        // Predicated region
        $region37: #{tpu_custom_call.1} parent=27 // pred_check
          %p220 = pneg %p219
        $region38: #{tpu_custom_call.1} parent=27 // pred_check_branch
          %222 = sbr.rel (%p220) target = $region40
        $region39: #{tpu_custom_call.1} parent=27 // pred_region
          %223 = vst [vmem:[#allocation2] sm:$0x3] 0.0
          %224 = vst [vmem:[#allocation3] sm:$0x3] 0.0
          %225 = vst [vmem:[#allocation4] sm:$0x3] 0.0
        $region40: #{tpu_custom_call.1} parent=27 // pred_fallthru
          _
        %v226 = vld [vmem:[%s191] sm:$0x3]
        %v227 = vld [vmem:[%s181] sm:$0x3]
        %v228 = vld [vmem:[%s181 + $0x2] sm:$0x3]
        %v229 = vld [vmem:[%s181 + $0x4] sm:$0x3]
        %v230 = vld [vmem:[%s181 + $0x6] sm:$0x3]
        %vm231 = vcmask 1041408
        %v232 = vsel %vm231, %v227, -inf
        %v233 = vsel %vm231, %v228, -inf
        %v234 = vsel %vm231, %v229, -inf
        %v235 = vsel %vm231, %v230, -inf
        %v236 = vmax.f32 %v232, %v233
        %v237 = vmax.f32 %v234, %v235
        %v238 = vmax.f32 %v236, %v237
        %v239 = vsub.f32 %v227, %v238
        %v240 = vmul.f32 %v239, 1.442695
        %v241 = vpow.pop %v240
        %v242 = vadd.f32 %v241, 0.0
        %vm243 = vcmp.eq.s32.totalorder %v226, 0
        %v244 = vsel %vm243, %v241, 0.0
        %v245 = vsub.f32 %v228, %v238
        %v246 = vmul.f32 %v245, 1.442695
        %v247 = vpow.pop %v246
        %v248 = vadd.f32 %v242, %v247
        %vm249 = vcmp.eq.s32.totalorder %v226, 1
        %v250 = vsel %vm249, %v247, %v244
        %v251 = vsub.f32 %v229, %v238
        %v252 = vmul.f32 %v251, 1.442695
        %v253 = vpow.pop %v252
        %v254 = vadd.f32 %v248, %v253
        %vm255 = vcmp.eq.s32.totalorder %v226, 2
        %v256 = vsel %vm255, %v253, %v250
        %v257 = vsub.f32 %v230, %v238
        %v258 = vmul.f32 %v257, 1.442695
        %v259 = vpow.pop %v258
        %v260 = vadd.f32 %v254, %v259
        %vm261 = vcmp.eq.s32.totalorder %v226, 3
        %v262 = vsel %vm261, %v259, %v256
        %vm263 = vcmp.ne.s32.totalorder %v226, 4294967295
        %v264 = vrcp.pop %v260
        %v265 = vmul.f32 %v260, %v264
        %v266 = vsub.f32 1.0, %v265
        %v267 = vmul.f32 %v264, %v266
        %v268 = vadd.f32 %v264, %v267
        %vm269 = vweird.f32 %v260
        %vm270 = vweird.f32 %v264
        %vm271 = vmor %vm269, %vm270
        %v272 = vsel %vm271, %v264, %v268
        %v273 = vand.u32 2147483647, %v260
        %vm274 = vcmp.eq.f32.partialorder %v273, 8.507059e+37
        %v275 = vand.u32 %v260, 2147483648
        %v276 = vor.u32 1.1754944e-38, %v275
        %v277 = vsel %vm274, %v276, %v272
        %v278 = vmul.f32 %v262, %v277
        %v279 = vsel %vm263, %v278, 1.0
        %v280 = vsub.f32 1.0, %v279
        %v281 = vmul.f32 %v280, %v280
        %v282 = vadd.f32 %v279, 1e-10
        %v283 = vmin.f32 %v282, 1.0
        %v284 = vlog2.pop %v283
        %v285 = vmul.f32 %v284, 0.6931472
        %v286 = vld [vmem:[#allocation2] sm:$0x3]
        %v287 = vsel %vm263, 1.0, 0.0
        %v288 = vadd.f32 %v286, %v287
        %289 = vst [vmem:[#allocation2] sm:$0x3] %v288
        %v290 = vld [vmem:[#allocation3] sm:$0x3]
        %v291 = vadd.f32 %v290, %v281
        %292 = vst [vmem:[#allocation3] sm:$0x3] %v291
        %v293 = vld [vmem:[#allocation4] sm:$0x3]
        %v294 = vmul.f32 %v281, %v285
        %v295 = vadd.f32 %v293, %v294
        %296 = vst [vmem:[#allocation4] sm:$0x3] %v295
        // Predicated region
        $region41: #{tpu_custom_call.1} parent=27 // pred_check
          %p297 = pneg %p219
        $region42: #{tpu_custom_call.1} parent=27 // pred_check_branch
          %299 = sbr.rel (%p297) target = $region44
        $region43: #{tpu_custom_call.1} parent=27 // pred_region
          %v300 = vld [vmem:[#allocation2] sm:$0x3]
          %v301 = vsel %vm231, %v300, 0.0
          %302 = vadd.xlane.f32.xlu0 %v301
          %v303 = vpop.xlane.xlu0 %302
          %v304 = vrot.slane %v303, 4
          %v305 = vadd.f32 %v303, %v304
          %v306 = vrot.slane %v305, 2
          %v307 = vadd.f32 %v305, %v306
          %v308 = vrot.slane %v307, 1
          %v309 = vadd.f32 %v307, %v308
          %s310 = vtos %v309
          %v311 = vld [vmem:[#allocation3] sm:$0x3]
          %v312 = vsel %vm231, %v311, 0.0
          %313 = vadd.xlane.f32.xlu0 %v312
          %v314 = vpop.xlane.xlu0 %313
          %v315 = vrot.slane %v314, 4
          %v316 = vadd.f32 %v314, %v315
          %v317 = vrot.slane %v316, 2
          %v318 = vadd.f32 %v316, %v317
          %v319 = vrot.slane %v318, 1
          %v320 = vadd.f32 %v318, %v319
          %s321 = vtos %v320
          %v322 = vld [vmem:[#allocation4] sm:$0x3]
          %v323 = vsel %vm231, %v322, 0.0
          %324 = vadd.xlane.f32.xlu0 %v323
          %v325 = vpop.xlane.xlu0 %324
          %v326 = vrot.slane %v325, 4
          %v327 = vadd.f32 %v325, %v326
          %v328 = vrot.slane %v327, 2
          %v329 = vadd.f32 %v327, %v328
          %v330 = vrot.slane %v329, 1
          %v331 = vadd.f32 %v329, %v330
          %s332 = vtos %v331
          %s333 = sadd.f32 %s321, 1e-10
          %v334 = vstv %s333
          %v335 = vrcp.pop %v334
          %v336 = vmul.f32 %v334, %v335
          %v337 = vsub.f32 1.0, %v336
          %v338 = vmul.f32 %v335, %v337
          %v339 = vadd.f32 %v335, %v338
          %vm340 = vweird.f32 %v334
          %vm341 = vweird.f32 %v335
          %vm342 = vmor %vm340, %vm341
          %v343 = vsel %vm342, %v335, %v339
          %v344 = vand.u32 2147483647, %v334
          %vm345 = vcmp.eq.f32.partialorder %v344, 8.507059e+37
          %v346 = vand.u32 %v334, 2147483648
          %v347 = vor.u32 1.1754944e-38, %v346
          %v348 = vsel %vm345, %v347, %v343
          %s349 = vtos %v348
          %s350 = smul.f32 %s310, %s349
          %s351 = smul.f32 %s350, %s332
          %s352 = ssub.f32 0.0, %s351
          %s353 = sadd.f32 %s310, 1e-10
          %v354 = vstv %s353
          %v355 = vrcp.pop %v354
          %v356 = vmul.f32 %v354, %v355
          %v357 = vsub.f32 1.0, %v356
          %v358 = vmul.f32 %v355, %v357
          %v359 = vadd.f32 %v355, %v358
          %vm360 = vweird.f32 %v354
          %vm361 = vweird.f32 %v355
          %vm362 = vmor %vm360, %vm361
          %v363 = vsel %vm362, %v355, %v359
          %v364 = vand.u32 2147483647, %v354
          %vm365 = vcmp.eq.f32.partialorder %v364, 8.507059e+37
          %v366 = vand.u32 %v354, 2147483648
          %v367 = vor.u32 1.1754944e-38, %v366
          %v368 = vsel %vm365, %v367, %v363
          %s369 = vtos %v368
          %s370 = smul.f32 %s352, %s369
          %v371 = vstv %s370
          %vm372 = vcmask 0
          %373 = vst.msk [vmem:[%s218] sm:$0x1] %vm372, %v371
        $region44: #{tpu_custom_call.1} parent=27 // pred_fallthru
          _
        %p374 = scmp.lt.s32.totalorder %s23, 1
        %s375 = scalar_select %p374, %s23, 1
        %s376 = scalar_lea.vmem %s2, %s375
        // Predicated region
        $region45: #{tpu_custom_call.1} parent=27 // pred_check
          %p377 = pneg %p105
        $region46: #{tpu_custom_call.1} parent=27 // pred_check_branch
          %379 = sbr.rel (%p377) target = $region48
        $region47: #{tpu_custom_call.1} parent=27 // pred_region
          _
        $region48: #{tpu_custom_call.1} parent=27 // pred_fallthru
          _
      $region28: #{tpu_custom_call.1} parent=5 // pred_fallthru
        _
      %p380 = scmp.le.s32.totalorder 2, %s14
      // Predicated region
      $region49: #{tpu_custom_call.1} parent=5 // pred_check
        %p381 = pneg %p380
      $region50: #{tpu_custom_call.1} parent=5 // pred_check_branch
        %383 = sbr.rel (%p381) target = $region52
      $region51: #{tpu_custom_call.1} parent=5 // pred_region
        %s384 = ssub.s32 %s14, 2
        // Predicated region
        $region53: #{tpu_custom_call.1} parent=51 // pred_check
          %p385 = pneg %p111
        $region54: #{tpu_custom_call.1} parent=51 // pred_check_branch
          %387 = sbr.rel (%p385) target = $region56
        $region55: #{tpu_custom_call.1} parent=51 // pred_region
          %p388 = scmp.lt.s32.totalorder %s25, 1
          %s389 = scalar_select %p388, %s25, 1
          %s390 = scalar_lea.vmem %s2, %s389
        $region56: #{tpu_custom_call.1} parent=51 // pred_fallthru
          _
      $region52: #{tpu_custom_call.1} parent=5 // pred_fallthru
        _
    $region6: #{tpu_custom_call.1} parent=1 // loop_footer
      %s18 = sadd.s32 1, %s14
    $region7: #{tpu_custom_call.1} parent=1 // loop_footer_branch
      %13 = sbr.rel target = $region3
    $region8: #{tpu_custom_call.1} parent=1 // loop_exit
      _
    %391 = vsyncpa [#allocation6], 1
    %s392 = scalar_lea.sflag [#allocation6], 1
    %393 = vsyncpa %s392, 1
    %394 = vsyncpa [#allocation8], 1
    %s395 = scalar_lea.sflag [#allocation8], 1
    %396 = vsyncpa %s395, 1

</llo_original>
